<compile_context>
chip_gen: v5e
topology: v5e:2x2
jax: 0.10.0
libtpu: 0.0.40
codegen_flags: <defaults>
</compile_context>

<pallas_src>
import jax
import jax.numpy as jnp
from jax.experimental import pallas as pl
from jax.experimental.pallas import tpu as pltpu


def _round_up(x, m):
    return ((x + m - 1) // m) * m


def _make_mlp_kernel(n_in):
    def kernel(*refs):
        xs = refs[:n_in]
        w1s = refs[n_in:2 * n_in]
        b1_ref, w2_ref, b2_ref, w3_ref, b3_ref, o_ref = refs[2 * n_in:]
        cdt = w2_ref.dtype  # MXU operand dtype (bf16 by default)

        # hidden layer 1: split-input Linear + ReLU (f32 accumulate; the
        # f32 -> bf16 input cast is done here, hidden under the MXU)
        acc = None
        for x_ref, w_ref in zip(xs, w1s):
            part = jnp.dot(x_ref[...].astype(cdt), w_ref[...],
                           preferred_element_type=jnp.float32)
            acc = part if acc is None else acc + part
        h = jnp.maximum(acc + b1_ref[...], 0.0)

        # hidden layer 2: Linear + ReLU
        h = jnp.dot(h.astype(cdt), w2_ref[...], preferred_element_type=jnp.float32)
        h = jnp.maximum(h + b2_ref[...], 0.0)

        # output layer: Linear (output_activation=None)
        y = jnp.dot(h.astype(cdt), w3_ref[...], preferred_element_type=jnp.float32)
        o_ref[...] = (y + b3_ref[...]).astype(o_ref.dtype)

    return kernel


def _pick_pack(batch, d_ins, hidden_sizes, d_out, mxu_dim):
    """Fold `pack` batch rows into the feature axis (block-diagonal weights) so
    stores are lane-dense without overshooting a single MXU tile."""
    widths = list(d_ins) + list(hidden_sizes) + [d_out]
    for pack in range(8, 0, -1):
        if pack * d_out > 128:          # no extra lane density beyond 128
            continue
        if pack * max(widths) > mxu_dim:  # keep block-diag weights in one MXU tile
            continue
        if batch % pack:                # keep the row-fold reshape a free bitcast
            continue
        return pack
    return 1


def _pick_rows_per_block(rows, pack, d_ins, h1, h2, d_out, in_bytes, out_bytes,
                         batch_tile, vmem_budget=20 * 1024 * 1024):
    if rows <= 8:
        return rows                      # full-extent block (allowed by Mosaic)
    rpb = max(8, batch_tile // pack)
    # keep >= 4 grid steps when the batch allows it (2 per v7x TensorCore so each
    # core still overlaps its input/output DMAs with compute)
    if rows >= 4 * 8:
        rpb = min(rpb, _round_up(pl.cdiv(rows, 4), 8))
    # per-step VMEM budget: double-buffered x/out tiles + f32 hidden temporaries;
    # stays under the 32 MiB default scoped VMEM limit on v7x.
    per_row = pack * (sum(d_ins) * in_bytes * 2
                      + d_out * out_bytes * 2
                      + (h1 + h2) * 4 * 2)
    cap = max(8, (vmem_budget // per_row) // 8 * 8)
    rpb = min(rpb, cap)
    return min(_round_up(rpb, 8), _round_up(rows, 8))


def mlp_forward(inputs, params, *, batch_tile=8192, compute_dtype=jnp.bfloat16,
                out_dtype=None, mxu_dim=256):
    """inputs: array or list of [B, d_i] arrays (ConcatModule args); params: dict of W/b.

    mxu_dim: 256 for v6e/v7x (default), 128 for v5e (smaller pack => fewer vmatmuls).
    out_dtype: set to jnp.bfloat16 if the consumer tolerates it (cuts HBM writeback).
    """
    # TODO(synk): allow_broadcast=True shape broadcasting of ConcatModule not implemented.
    xs = list(inputs) if isinstance(inputs, (list, tuple)) else [inputs]
    B = int(xs[0].shape[0])
    d_ins = [int(x.shape[-1]) for x in xs]

    w1, b1 = params["w1"], params["b1"]
    w2, b2 = params["w2"], params["b2"]
    w3, b3 = params["w3"], params["b3"]
    H1, H2, D_out = int(w1.shape[1]), int(w2.shape[1]), int(w3.shape[1])
    assert sum(d_ins) == w1.shape[0], "concat width must match W1 input size"

    cdt = jnp.dtype(compute_dtype)
    odt = jnp.dtype(out_dtype) if out_dtype is not None else jnp.dtype(xs[0].dtype)
    in_bytes = jnp.dtype(xs[0].dtype).itemsize
    out_bytes = odt.itemsize

    # ---- lane-dense, MXU-tile-aware row packing ----------------------------
    pack = _pick_pack(B, d_ins, [H1, H2], D_out, mxu_dim)
    eye = jnp.eye(pack, dtype=w1.dtype)

    def pack_w(w):
        return (jnp.kron(eye, w) if pack > 1 else w).astype(cdt)  # block-diagonal

    def pack_b(b):
        return (jnp.tile(b, (1, pack)) if pack > 1 else b).astype(jnp.float32)

    w1_parts, off = [], 0
    for d in d_ins:                      # W1 split row-wise per ConcatModule input
        w1_parts.append(pack_w(w1[off:off + d]))
        off += d
    w2p, w3p = pack_w(w2), pack_w(w3)
    b1p, b2p, b3p = pack_b(b1), pack_b(b2), pack_b(b3)

    # free row-major "fold pack rows into features" reshapes (pack divides B)
    rows = B // pack
    xps = [x.reshape(rows, pack * d) for x, d in zip(xs, d_ins)]

    # ---- batch tile selection ----------------------------------------------
    rpb = _pick_rows_per_block(rows, pack, d_ins, H1, H2, D_out,
                               in_bytes, out_bytes, batch_tile)
    grid = (pl.cdiv(rows, rpb),)         # boundary block handled by Pallas masking

    in_specs = [pl.BlockSpec((rpb, pack * d), lambda i: (i, 0)) for d in d_ins]
    in_specs += [pl.BlockSpec(w.shape, lambda i: (0, 0)) for w in w1_parts]
    in_specs += [pl.BlockSpec(b1p.shape, lambda i: (0, 0)),
                 pl.BlockSpec(w2p.shape, lambda i: (0, 0)),
                 pl.BlockSpec(b2p.shape, lambda i: (0, 0)),
                 pl.BlockSpec(w3p.shape, lambda i: (0, 0)),
                 pl.BlockSpec(b3p.shape, lambda i: (0, 0))]

    flops = 2 * B * (sum(d_ins) * H1 + H1 * H2 + H2 * D_out)
    bytes_accessed = (B * sum(d_ins) * in_bytes + B * D_out * out_bytes
                      + sum(int(w.size) for w in w1_parts) * cdt.itemsize
                      + int(w2p.size + w3p.size) * cdt.itemsize
                      + int(b1p.size + b2p.size + b3p.size) * 4)

    out = pl.pallas_call(
        _make_mlp_kernel(len(xs)),
        out_shape=jax.ShapeDtypeStruct((rows, pack * D_out), odt),
        grid_spec=pltpu.PrefetchScalarGridSpec(
            num_scalar_prefetch=0,
            grid=grid,
            in_specs=in_specs,
            out_specs=pl.BlockSpec((rpb, pack * D_out), lambda i: (i, 0)),
        ),
        compiler_params=pltpu.CompilerParams(
            dimension_semantics=("parallel",)),
        cost_estimate=pl.CostEstimate(
            flops=flops, transcendentals=0, bytes_accessed=bytes_accessed),
    )(*xps, *w1_parts, b1p, w2p, b2p, w3p, b3p)

    return out.reshape(B, D_out)         # free: undo the row packing


def init_mlp_params(key, mlp_sizes, dtype=jnp.float32):
    """Deterministic init matching `.normal_(0, 0.001)` for weights and biases.

    mlp_sizes = [input_size, hidden..., output_size]; input_size may be a
    tuple (ConcatModule inputs), in which case last_layer_size = sum(...).
    """
    # TODO(synk): list/tuple-valued output_size (ListOutModule multi-head) not implemented.
    input_size = mlp_sizes[0]
    last = input_size if isinstance(input_size, int) else sum(input_size)
    sizes = [last] + list(mlp_sizes[1:])
    params = {}
    for li, (din, dout) in enumerate(zip(sizes[:-1], sizes[1:]), start=1):
        key, kw, kb = jax.random.split(key, 3)
        # stored as [in, out] (transpose of PyTorch's [out, in])
        params[f"w{li}"] = (0.001 * jax.random.normal(kw, (din, dout))).astype(dtype)
        params[f"b{li}"] = (0.001 * jax.random.normal(kb, (1, dout))).astype(dtype)
    return params


def mlp_reference(inputs, params):
    """Pure-JAX f32 reference of the same forward, for a correctness check."""
    x = inputs[0] if len(inputs) == 1 else jnp.concatenate(inputs, axis=-1)
    h = jnp.maximum(x @ params["w1"] + params["b1"], 0.0)
    h = jnp.maximum(h @ params["w2"] + params["b2"], 0.0)
    return h @ params["w3"] + params["b3"]


if __name__ == "__main__":
    # MLP(mlp_sizes=[(20, 12), 64, 64, 16], activation=nn.ReLU, output_activation=None)
    key = jax.random.PRNGKey(0)
    k_p, k_a, k_b, k_c, k_d = jax.random.split(key, 5)

    mlp_sizes = [(20, 12), 64, 64, 16]
    params = init_mlp_params(k_p, mlp_sizes)

    # small ConcatModule inputs
    batch = 8
    xa = jax.random.normal(k_a, (batch, 20), dtype=jnp.float32)
    xb = jax.random.normal(k_b, (batch, 12), dtype=jnp.float32)

    out = jax.block_until_ready(mlp_forward([xa, xb], params))
    ref = mlp_reference([xa, xb], params)
    assert out.shape == (batch, 16)
    assert jnp.allclose(out, ref, rtol=2e-2, atol=5e-5), float(jnp.max(jnp.abs(out - ref)))

    # a batch that is not a multiple of the tile exercises the masked boundary-block
    # path (multi-step grid, no wrapper pad/unpad copies)
    batch2 = 200
    xc = jax.random.normal(k_c, (batch2, 20), dtype=jnp.float32)
    xd = jax.random.normal(k_d, (batch2, 12), dtype=jnp.float32)
    out2 = jax.block_until_ready(mlp_forward([xc, xd], params))
    ref2 = mlp_reference([xc, xd], params)
    assert out2.shape == (batch2, 16)
    assert jnp.allclose(out2, ref2, rtol=2e-2, atol=5e-5), float(jnp.max(jnp.abs(out2 - ref2)))

    print("KERNEL_OK")
</pallas_src>

<mosaic_0001>
module attributes {stable_mosaic.version = 11 : i64} {
  func.func @kernel(%arg0: i32, %arg1: memref<2x80xf32, #tpu.memory_space<vmem>>, %arg2: memref<2x48xf32, #tpu.memory_space<vmem>>, %arg3: memref<80x256xbf16, #tpu.memory_space<vmem>>, %arg4: memref<48x256xbf16, #tpu.memory_space<vmem>>, %arg5: memref<1x256xf32, #tpu.memory_space<vmem>>, %arg6: memref<256x256xbf16, #tpu.memory_space<vmem>>, %arg7: memref<1x256xf32, #tpu.memory_space<vmem>>, %arg8: memref<256x64xbf16, #tpu.memory_space<vmem>>, %arg9: memref<1x64xf32, #tpu.memory_space<vmem>>, %arg10: memref<2x64xf32, #tpu.memory_space<vmem>>) attributes {dimension_semantics = [#tpu.dimension_semantics<parallel>], iteration_bounds = array<i64: 1>, scalar_prefetch = 0 : i64, scratch_operands = 0 : i64, tpu.core_type = #tpu.core_type<tc>, window_params = [{transform_indices = @transform_0, window_bounds = array<i64: 2, 80>}, {transform_indices = @transform_1, window_bounds = array<i64: 2, 48>}, {pipeline_mode = #tpu.pipeline_mode<synchronous>, transform_indices = @transform_2, window_bounds = array<i64: 80, 256>}, {pipeline_mode = #tpu.pipeline_mode<synchronous>, transform_indices = @transform_3, window_bounds = array<i64: 48, 256>}, {pipeline_mode = #tpu.pipeline_mode<synchronous>, transform_indices = @transform_4, window_bounds = array<i64: 1, 256>}, {pipeline_mode = #tpu.pipeline_mode<synchronous>, transform_indices = @transform_5, window_bounds = array<i64: 256, 256>}, {pipeline_mode = #tpu.pipeline_mode<synchronous>, transform_indices = @transform_6, window_bounds = array<i64: 1, 256>}, {pipeline_mode = #tpu.pipeline_mode<synchronous>, transform_indices = @transform_7, window_bounds = array<i64: 256, 64>}, {pipeline_mode = #tpu.pipeline_mode<synchronous>, transform_indices = @transform_8, window_bounds = array<i64: 1, 64>}, {transform_indices = @transform_9, window_bounds = array<i64: 2, 64>}]} {
    %c0 = arith.constant 0 : index
    %c0_0 = arith.constant 0 : index
    %0 = vector.load %arg1[%c0, %c0_0] : memref<2x80xf32, #tpu.memory_space<vmem>>, vector<2x80xf32>
    %1 = arith.truncf %0 : vector<2x80xf32> to vector<2x80xbf16>
    %c0_1 = arith.constant 0 : index
    %c0_2 = arith.constant 0 : index
    %2 = vector.load %arg3[%c0_1, %c0_2] : memref<80x256xbf16, #tpu.memory_space<vmem>>, vector<80x256xbf16>
    %cst = arith.constant dense<0.000000e+00> : vector<2x256xf32>
    %3 = tpu.matmul %1, %2, %cst {dimension_numbers = #tpu.dot_dimension_numbers<[1], [0], [0], [1], [0, 0, 1, 1], [], []>} : vector<2x80xbf16>, vector<80x256xbf16>, vector<2x256xf32> -> vector<2x256xf32>
    %c0_3 = arith.constant 0 : index
    %c0_4 = arith.constant 0 : index
    %4 = vector.load %arg2[%c0_3, %c0_4] : memref<2x48xf32, #tpu.memory_space<vmem>>, vector<2x48xf32>
    %5 = arith.truncf %4 : vector<2x48xf32> to vector<2x48xbf16>
    %c0_5 = arith.constant 0 : index
    %c0_6 = arith.constant 0 : index
    %6 = vector.load %arg4[%c0_5, %c0_6] : memref<48x256xbf16, #tpu.memory_space<vmem>>, vector<48x256xbf16>
    %cst_7 = arith.constant dense<0.000000e+00> : vector<2x256xf32>
    %7 = tpu.matmul %5, %6, %cst_7 {dimension_numbers = #tpu.dot_dimension_numbers<[1], [0], [0], [1], [0, 0, 1, 1], [], []>} : vector<2x48xbf16>, vector<48x256xbf16>, vector<2x256xf32> -> vector<2x256xf32>
    %8 = arith.addf %3, %7 : vector<2x256xf32>
    %c0_8 = arith.constant 0 : index
    %c0_9 = arith.constant 0 : index
    %9 = vector.load %arg5[%c0_8, %c0_9] : memref<1x256xf32, #tpu.memory_space<vmem>>, vector<1x256xf32>
    %10 = vector.broadcast %9 : vector<1x256xf32> to vector<2x256xf32>
    %11 = arith.addf %8, %10 : vector<2x256xf32>
    %cst_10 = arith.constant 0.000000e+00 : f32
    %12 = vector.broadcast %cst_10 : f32 to vector<2x256xf32>
    %13 = arith.maximumf %11, %12 : vector<2x256xf32>
    %14 = arith.truncf %13 : vector<2x256xf32> to vector<2x256xbf16>
    %c0_11 = arith.constant 0 : index
    %c0_12 = arith.constant 0 : index
    %15 = vector.load %arg6[%c0_11, %c0_12] : memref<256x256xbf16, #tpu.memory_space<vmem>>, vector<256x256xbf16>
    %cst_13 = arith.constant dense<0.000000e+00> : vector<2x256xf32>
    %16 = tpu.matmul %14, %15, %cst_13 {dimension_numbers = #tpu.dot_dimension_numbers<[1], [0], [0], [1], [0, 0, 1, 1], [], []>} : vector<2x256xbf16>, vector<256x256xbf16>, vector<2x256xf32> -> vector<2x256xf32>
    %c0_14 = arith.constant 0 : index
    %c0_15 = arith.constant 0 : index
    %17 = vector.load %arg7[%c0_14, %c0_15] : memref<1x256xf32, #tpu.memory_space<vmem>>, vector<1x256xf32>
    %18 = vector.broadcast %17 : vector<1x256xf32> to vector<2x256xf32>
    %19 = arith.addf %16, %18 : vector<2x256xf32>
    %cst_16 = arith.constant 0.000000e+00 : f32
    %20 = vector.broadcast %cst_16 : f32 to vector<2x256xf32>
    %21 = arith.maximumf %19, %20 : vector<2x256xf32>
    %22 = arith.truncf %21 : vector<2x256xf32> to vector<2x256xbf16>
    %c0_17 = arith.constant 0 : index
    %c0_18 = arith.constant 0 : index
    %23 = vector.load %arg8[%c0_17, %c0_18] : memref<256x64xbf16, #tpu.memory_space<vmem>>, vector<256x64xbf16>
    %cst_19 = arith.constant dense<0.000000e+00> : vector<2x64xf32>
    %24 = tpu.matmul %22, %23, %cst_19 {dimension_numbers = #tpu.dot_dimension_numbers<[1], [0], [0], [1], [0, 0, 1, 1], [], []>} : vector<2x256xbf16>, vector<256x64xbf16>, vector<2x64xf32> -> vector<2x64xf32>
    %c0_20 = arith.constant 0 : index
    %c0_21 = arith.constant 0 : index
    %25 = vector.load %arg9[%c0_20, %c0_21] : memref<1x64xf32, #tpu.memory_space<vmem>>, vector<1x64xf32>
    %26 = vector.broadcast %25 : vector<1x64xf32> to vector<2x64xf32>
    %27 = arith.addf %24, %26 : vector<2x64xf32>
    %c0_22 = arith.constant 0 : index
    %c0_23 = arith.constant 0 : index
    %28 = vector.load %arg10[%c0_22, %c0_23] : memref<2x64xf32, #tpu.memory_space<vmem>>, vector<2x64xf32>
    tpu.vector_store %arg10[%c0_22, %c0_23], %27 {strides = array<i32>} : memref<2x64xf32, #tpu.memory_space<vmem>>, vector<2x64xf32>,
    return
  }
  func.func @transform_0(%arg0: i32) -> (i32, i32) {
    %c0_i32 = arith.constant 0 : i32
    %c0_i32_0 = arith.constant 0 : i32
    return %arg0, %c0_i32 : i32, i32
  }
  func.func @transform_1(%arg0: i32) -> (i32, i32) {
    %c0_i32 = arith.constant 0 : i32
    %c0_i32_0 = arith.constant 0 : i32
    return %arg0, %c0_i32 : i32, i32
  }
  func.func @transform_2(%arg0: i32) -> (i32, i32) {
    %c0_i32 = arith.constant 0 : i32
    %c0_i32_0 = arith.constant 0 : i32
    %c0_i32_1 = arith.constant 0 : i32
    return %c0_i32, %c0_i32_0 : i32, i32
  }
  func.func @transform_3(%arg0: i32) -> (i32, i32) {
    %c0_i32 = arith.constant 0 : i32
    %c0_i32_0 = arith.constant 0 : i32
    %c0_i32_1 = arith.constant 0 : i32
    return %c0_i32, %c0_i32_0 : i32, i32
  }
  func.func @transform_4(%arg0: i32) -> (i32, i32) {
    %c0_i32 = arith.constant 0 : i32
    %c0_i32_0 = arith.constant 0 : i32
    %c0_i32_1 = arith.constant 0 : i32
    return %c0_i32, %c0_i32_0 : i32, i32
  }
  func.func @transform_5(%arg0: i32) -> (i32, i32) {
    %c0_i32 = arith.constant 0 : i32
    %c0_i32_0 = arith.constant 0 : i32
    %c0_i32_1 = arith.constant 0 : i32
    return %c0_i32, %c0_i32_0 : i32, i32
  }
  func.func @transform_6(%arg0: i32) -> (i32, i32) {
    %c0_i32 = arith.constant 0 : i32
    %c0_i32_0 = arith.constant 0 : i32
    %c0_i32_1 = arith.constant 0 : i32
    return %c0_i32, %c0_i32_0 : i32, i32
  }
  func.func @transform_7(%arg0: i32) -> (i32, i32) {
    %c0_i32 = arith.constant 0 : i32
    %c0_i32_0 = arith.constant 0 : i32
    %c0_i32_1 = arith.constant 0 : i32
    return %c0_i32, %c0_i32_0 : i32, i32
  }
  func.func @transform_8(%arg0: i32) -> (i32, i32) {
    %c0_i32 = arith.constant 0 : i32
    %c0_i32_0 = arith.constant 0 : i32
    %c0_i32_1 = arith.constant 0 : i32
    return %c0_i32, %c0_i32_0 : i32, i32
  }
  func.func @transform_9(%arg0: i32) -> (i32, i32) {
    %c0_i32 = arith.constant 0 : i32
    %c0_i32_0 = arith.constant 0 : i32
    return %arg0, %c0_i32 : i32, i32
  }
}

</mosaic_0001>

<llo_original>
// kernel: tpu_custom_call.1
$region0: #{tpu_custom_call.1}
  #allocation0 [shape = 'u32[]', space=smem, size = 0x4, offset = 0x4, fixed_abs, tag = 'smem constant byte address 0x4 - core index']
  #allocation1 [shape = 'u32[72,128]{1,0:T(1,128)}', space=vmem, size = 0x9000, scoped, tag = 'internal scratch']
  %s0 = inlined_call_operand.vmem [shape: f32[2,80], index: 0, kind: input, shape index: {}]
  %s1 = inlined_call_operand.vmem [shape: f32[2,48], index: 1, kind: input, shape index: {}]
  %s2 = inlined_call_operand.vmem [shape: bf16[80,256], index: 2, kind: input, shape index: {}]
  %s3 = inlined_call_operand.vmem [shape: bf16[48,256], index: 3, kind: input, shape index: {}]
  %s4 = inlined_call_operand.vmem [shape: f32[1,256], index: 4, kind: input, shape index: {}]
  %s5 = inlined_call_operand.hbm [shape: bf16[256,256], index: 5, kind: input, shape index: {}]
  %s6 = inlined_call_operand.vmem [shape: f32[1,256], index: 6, kind: input, shape index: {}]
  %s7 = inlined_call_operand.vmem [shape: bf16[256,64], index: 7, kind: input, shape index: {}]
  %s8 = inlined_call_operand.vmem [shape: f32[1,64], index: 8, kind: input, shape index: {}]
  %s9 = inlined_call_operand.hbm [shape: f32[2,64], index: 9, kind: output, shape index: {}]
  %s10 = sld [smem:[#allocation0]]
  $region50: #{tpu_custom_call.1} parent=0
    _
  %s12 = ssub.s32 1, %s10
  %s13 = scalar_select 0, %s12, %s10
  $region1: #{tpu_custom_call.1} parent=0
    #allocation2 [shape = 'u8[131072]{0}', space=vmem, size = 0x20000, scoped, tag = 'input window, operand 5, single buffered']
    #allocation3 [shape = 's32[1]{0}', space=sflag, size = 0x4, scoped, tag = 'scoped memory for tpu_custom_call.1']
    #allocation4 [shape = 's32[1]{0}', space=sflag, size = 0x4, scoped, tag = 'scoped memory for tpu_custom_call.1']
    #allocation5 [shape = 'u8[1024]{0}', space=vmem, size = 0x400, scoped, tag = 'output window, operand 0, single buffered']
    %14 = vsyncpa [#allocation3], 0
    %15 = vsyncpa [#allocation4], 0
    // Predicated region
    $region2: #{tpu_custom_call.1} parent=1 // pred_check
      _
    $region3: #{tpu_custom_call.1} parent=1 // pred_check_branch
      %17 = sbr.rel (0) target = $region5
    $region4: #{tpu_custom_call.1} parent=1 // pred_region
      _
    $region5: #{tpu_custom_call.1} parent=1 // pred_fallthru
      _
    // Predicated region
    $region6: #{tpu_custom_call.1} parent=1 // pred_check
      _
    $region7: #{tpu_custom_call.1} parent=1 // pred_check_branch
      %19 = sbr.rel (0) target = $region9
    $region8: #{tpu_custom_call.1} parent=1 // pred_region
      _
    $region9: #{tpu_custom_call.1} parent=1 // pred_fallthru
      _
    // Predicated region
    $region10: #{tpu_custom_call.1} parent=1 // pred_check
      _
    $region11: #{tpu_custom_call.1} parent=1 // pred_check_branch
      %21 = sbr.rel (0) target = $region13
    $region12: #{tpu_custom_call.1} parent=1 // pred_region
      _
    $region13: #{tpu_custom_call.1} parent=1 // pred_fallthru
      _
    // Predicated region
    $region14: #{tpu_custom_call.1} parent=1 // pred_check
      _
    $region15: #{tpu_custom_call.1} parent=1 // pred_check_branch
      %23 = sbr.rel (0) target = $region17
    $region16: #{tpu_custom_call.1} parent=1 // pred_region
      _
    $region17: #{tpu_custom_call.1} parent=1 // pred_fallthru
      _
    // Predicated region
    $region18: #{tpu_custom_call.1} parent=1 // pred_check
      _
    $region19: #{tpu_custom_call.1} parent=1 // pred_check_branch
      %25 = sbr.rel (0) target = $region21
    $region20: #{tpu_custom_call.1} parent=1 // pred_region
      _
    $region21: #{tpu_custom_call.1} parent=1 // pred_fallthru
      _
    // Predicated region
    $region22: #{tpu_custom_call.1} parent=1 // pred_check
      _
    $region23: #{tpu_custom_call.1} parent=1 // pred_check_branch
      %27 = sbr.rel (0) target = $region25
    $region24: #{tpu_custom_call.1} parent=1 // pred_region
      %29 = vsyncadd [#allocation3], 0
      %s30 = sshll.u32 %s5, 4
      %s31 = int_to_ptr.hbm [resolvable:$true] %s30
      %s32 = sshll.u32 [#allocation2], 4
      %s33 = int_to_ptr.vmem [resolvable:$true] %s32
      %38 = dma.hbm_to_vmem [thread:$0]  %s31, 4096, %s33, [#allocation3], 128, 128, 8
    $region25: #{tpu_custom_call.1} parent=1 // pred_fallthru
      _
    // Predicated region
    $region26: #{tpu_custom_call.1} parent=1 // pred_check
      _
    $region27: #{tpu_custom_call.1} parent=1 // pred_check_branch
      %40 = sbr.rel (0) target = $region29
    $region28: #{tpu_custom_call.1} parent=1 // pred_region
      _
    $region29: #{tpu_custom_call.1} parent=1 // pred_fallthru
      _
    // Predicated region
    $region30: #{tpu_custom_call.1} parent=1 // pred_check
      _
    $region31: #{tpu_custom_call.1} parent=1 // pred_check_branch
      %42 = sbr.rel (0) target = $region33
    $region32: #{tpu_custom_call.1} parent=1 // pred_region
      _
    $region33: #{tpu_custom_call.1} parent=1 // pred_fallthru
      _
    // Predicated region
    $region34: #{tpu_custom_call.1} parent=1 // pred_check
      _
    $region35: #{tpu_custom_call.1} parent=1 // pred_check_branch
      %44 = sbr.rel (0) target = $region37
    $region36: #{tpu_custom_call.1} parent=1 // pred_region
      _
    $region37: #{tpu_custom_call.1} parent=1 // pred_fallthru
      _
    // Predicated region
    $region38: #{tpu_custom_call.1} parent=1 // pred_check
      _
    $region39: #{tpu_custom_call.1} parent=1 // pred_check_branch
      %46 = sbr.rel (0) target = $region41
    $region40: #{tpu_custom_call.1} parent=1 // pred_region
      %48 = dma.done [#allocation3], 4096
    $region41: #{tpu_custom_call.1} parent=1 // pred_fallthru
      _
    %v50 = vld [vmem:[%s0] sm:$0x3]
    %v51 = vpack.c.bf16 %v50, %v50
    %v52 = vld [vmem:[%s2] sm:$0xff]
    %v53 = vld [vmem:[%s2 + $0x8] sm:$0xff]
    %v54 = vld [vmem:[%s2 + $0x10] sm:$0xff]
    %v55 = vld [vmem:[%s2 + $0x18] sm:$0xff]
    %v56 = vld [vmem:[%s2 + $0x20] sm:$0xff]
    %v57 = vld [vmem:[%s2 + $0x28] sm:$0xff]
    %v58 = vld [vmem:[%s2 + $0x30] sm:$0xff]
    %v59 = vld [vmem:[%s2 + $0x38] sm:$0xff]
    %v60 = vld [vmem:[%s2 + $0x40] sm:$0xff]
    %v61 = vld [vmem:[%s2 + $0x48] sm:$0xff]
    %v62 = vld [vmem:[%s1] sm:$0x3]
    %v63 = vpack.c.bf16 %v62, %v62
    %v64 = vld [vmem:[%s3] sm:$0xff]
    %v65 = vld [vmem:[%s3 + $0x8] sm:$0xff]
    %v66 = vld [vmem:[%s3 + $0x10] sm:$0xff]
    %v67 = vld [vmem:[%s3 + $0x18] sm:$0xff]
    %v68 = vld [vmem:[%s3 + $0x20] sm:$0xff]
    %v69 = vld [vmem:[%s3 + $0x28] sm:$0xff]
    %v76 = vunpack.c.l.b16 %v64
    %v77 = vunpack.c.h.b16 %v64
    %v78 = vunpack.c.l.b16 %v65
    %v79 = vunpack.c.h.b16 %v65
    %v80 = vunpack.c.l.b16 %v66
    %v81 = vunpack.c.h.b16 %v66
    %v82 = vunpack.c.l.b16 %v67
    %v83 = vunpack.c.h.b16 %v67
    %v84 = vunpack.c.l.b16 %v68
    %v85 = vunpack.c.h.b16 %v68
    %v86 = vunpack.c.l.b16 %v69
    %v87 = vunpack.c.h.b16 %v69
    %v88 = vpack.c.b16 %v78, %v76
    %v89 = vpack.c.b16 %v79, %v77
    %v90 = vpack.c.b16 %v82, %v80
    %v91 = vpack.c.b16 %v83, %v81
    %v92 = vpack.c.b16 %v86, %v84
    %v93 = vpack.c.b16 %v87, %v85
    %vm100 = vcmask 392192
    %v102 = vsel %vm100, %v63, 0
    %104 = vmatpush.bf16.msra.mxu0 0
    %105 = vmatpush.bf16.msra.mxu0 0
    %106 = vmatpush.bf16.msra.mxu0 0
    %107 = vmatpush.bf16.msra.mxu0 0
    %108 = vmatpush.bf16.msra.mxu0 0
    %109 = vmatpush.bf16.msra.mxu0 %v92
    %110 = vmatpush.bf16.msra.mxu0 %v90
    %111 = vmatpush.bf16.msra.mxu0 %v88
    %112 = vmatmul.bf16.gmra.mxu0 %v102
    %v113 = vpop.f32.mrf.mxu0
    %v114 = vadd.f32 0.0, %v113
    %v115 = vpop.f32.mrf.mxu0
    %116 = vdwg.mxu0
    %117 = vmatpush.bf16.msra.mxu0 0
    %118 = vmatpush.bf16.msra.mxu0 0
    %119 = vmatpush.bf16.msra.mxu0 0
    %120 = vmatpush.bf16.msra.mxu0 0
    %121 = vmatpush.bf16.msra.mxu0 0
    %122 = vmatpush.bf16.msra.mxu0 %v93
    %123 = vmatpush.bf16.msra.mxu0 %v91
    %124 = vmatpush.bf16.msra.mxu0 %v89
    %125 = vmatmul.bf16.gmra.mxu0 %v102
    %v126 = vpop.f32.mrf.mxu0
    %v127 = vadd.f32 0.0, %v126
    %v128 = vpop.f32.mrf.mxu0
    %129 = vdwg.mxu0
    %v140 = vunpack.c.l.b16 %v52
    %v141 = vunpack.c.h.b16 %v52
    %v142 = vunpack.c.l.b16 %v53
    %v143 = vunpack.c.h.b16 %v53
    %v144 = vunpack.c.l.b16 %v54
    %v145 = vunpack.c.h.b16 %v54
    %v146 = vunpack.c.l.b16 %v55
    %v147 = vunpack.c.h.b16 %v55
    %v148 = vunpack.c.l.b16 %v56
    %v149 = vunpack.c.h.b16 %v56
    %v150 = vunpack.c.l.b16 %v57
    %v151 = vunpack.c.h.b16 %v57
    %v152 = vunpack.c.l.b16 %v58
    %v153 = vunpack.c.h.b16 %v58
    %v154 = vunpack.c.l.b16 %v59
    %v155 = vunpack.c.h.b16 %v59
    %v156 = vunpack.c.l.b16 %v60
    %v157 = vunpack.c.h.b16 %v60
    %v158 = vunpack.c.l.b16 %v61
    %v159 = vunpack.c.h.b16 %v61
    %v160 = vpack.c.b16 %v142, %v140
    %v161 = vpack.c.b16 %v143, %v141
    %v162 = vpack.c.b16 %v146, %v144
    %v163 = vpack.c.b16 %v147, %v145
    %v164 = vpack.c.b16 %v150, %v148
    %v165 = vpack.c.b16 %v151, %v149
    %v166 = vpack.c.b16 %v154, %v152
    %v167 = vpack.c.b16 %v155, %v153
    %v168 = vpack.c.b16 %v158, %v156
    %v169 = vpack.c.b16 %v159, %v157
    %vm180 = vcmask 654336
    %v182 = vsel %vm180, %v51, 0
    %184 = vmatpush.bf16.msra.mxu0 0
    %185 = vmatpush.bf16.msra.mxu0 0
    %186 = vmatpush.bf16.msra.mxu0 0
    %187 = vmatpush.bf16.msra.mxu0 %v168
    %188 = vmatpush.bf16.msra.mxu0 %v166
    %189 = vmatpush.bf16.msra.mxu0 %v164
    %190 = vmatpush.bf16.msra.mxu0 %v162
    %191 = vmatpush.bf16.msra.mxu0 %v160
    %192 = vmatmul.bf16.gmra.mxu0 %v182
    %v193 = vpop.f32.mrf.mxu0
    %v194 = vadd.f32 %v114, %v193
    %v195 = vpop.f32.mrf.mxu0
    %196 = vdwg.mxu0
    %197 = vmatpush.bf16.msra.mxu0 0
    %198 = vmatpush.bf16.msra.mxu0 0
    %199 = vmatpush.bf16.msra.mxu0 0
    %200 = vmatpush.bf16.msra.mxu0 %v169
    %201 = vmatpush.bf16.msra.mxu0 %v167
    %202 = vmatpush.bf16.msra.mxu0 %v165
    %203 = vmatpush.bf16.msra.mxu0 %v163
    %204 = vmatpush.bf16.msra.mxu0 %v161
    %205 = vmatmul.bf16.gmra.mxu0 %v182
    %v206 = vpop.f32.mrf.mxu0
    %v207 = vadd.f32 %v127, %v206
    %v208 = vpop.f32.mrf.mxu0
    %209 = vdwg.mxu0
    %v210 = vld [vmem:[%s4] sm:$0x3]
    %v212 = vperm.slane %v210, 0
    %v213 = vperm.slane %v210, 1
    %v216 = vadd.f32 %v194, %v212
    %v217 = vadd.f32 %v207, %v213
    %v218 = vmax.f32 %v216, 0.0
    %v219 = vmax.f32 %v217, 0.0
    %v220 = vpack.c.bf16 %v218, %v218
    %v221 = vpack.c.bf16 %v219, %v219
    %v222 = vld [vmem:[#allocation2] sm:$0xff]
    %v223 = vld [vmem:[#allocation2 + $0x8] sm:$0xff]
    %v224 = vld [vmem:[#allocation2 + $0x10] sm:$0xff]
    %v225 = vld [vmem:[#allocation2 + $0x18] sm:$0xff]
    %v226 = vld [vmem:[#allocation2 + $0x20] sm:$0xff]
    %v227 = vld [vmem:[#allocation2 + $0x28] sm:$0xff]
    %v228 = vld [vmem:[#allocation2 + $0x30] sm:$0xff]
    %v229 = vld [vmem:[#allocation2 + $0x38] sm:$0xff]
    %v230 = vld [vmem:[#allocation2 + $0x40] sm:$0xff]
    %v231 = vld [vmem:[#allocation2 + $0x48] sm:$0xff]
    %v232 = vld [vmem:[#allocation2 + $0x50] sm:$0xff]
    %v233 = vld [vmem:[#allocation2 + $0x58] sm:$0xff]
    %v234 = vld [vmem:[#allocation2 + $0x60] sm:$0xff]
    %v235 = vld [vmem:[#allocation2 + $0x68] sm:$0xff]
    %v236 = vld [vmem:[#allocation2 + $0x70] sm:$0xff]
    %v237 = vld [vmem:[#allocation2 + $0x78] sm:$0xff]
    %v238 = vld [vmem:[#allocation2 + $0x80] sm:$0xff]
    %v239 = vld [vmem:[#allocation2 + $0x88] sm:$0xff]
    %v240 = vld [vmem:[#allocation2 + $0x90] sm:$0xff]
    %v241 = vld [vmem:[#allocation2 + $0x98] sm:$0xff]
    %v242 = vld [vmem:[#allocation2 + $0xa0] sm:$0xff]
    %v243 = vld [vmem:[#allocation2 + $0xa8] sm:$0xff]
    %v244 = vld [vmem:[#allocation2 + $0xb0] sm:$0xff]
    %v245 = vld [vmem:[#allocation2 + $0xb8] sm:$0xff]
    %v246 = vld [vmem:[#allocation2 + $0xc0] sm:$0xff]
    %v247 = vld [vmem:[#allocation2 + $0xc8] sm:$0xff]
    %v248 = vld [vmem:[#allocation2 + $0xd0] sm:$0xff]
    %v249 = vld [vmem:[#allocation2 + $0xd8] sm:$0xff]
    %v250 = vld [vmem:[#allocation2 + $0xe0] sm:$0xff]
    %v251 = vld [vmem:[#allocation2 + $0xe8] sm:$0xff]
    %v252 = vld [vmem:[#allocation2 + $0xf0] sm:$0xff]
    %v253 = vld [vmem:[#allocation2 + $0xf8] sm:$0xff]
    %v254 = vld [vmem:[%s6] sm:$0x3]
    %v256 = vperm.slane %v254, 0
    %v257 = vperm.slane %v254, 1
    %v292 = vunpack.c.l.b16 %v222
    %v293 = vunpack.c.h.b16 %v222
    %v294 = vunpack.c.l.b16 %v223
    %v295 = vunpack.c.h.b16 %v223
    %v296 = vunpack.c.l.b16 %v224
    %v297 = vunpack.c.h.b16 %v224
    %v298 = vunpack.c.l.b16 %v225
    %v299 = vunpack.c.h.b16 %v225
    %v300 = vunpack.c.l.b16 %v226
    %v301 = vunpack.c.h.b16 %v226
    %v302 = vunpack.c.l.b16 %v227
    %v303 = vunpack.c.h.b16 %v227
    %v304 = vunpack.c.l.b16 %v228
    %v305 = vunpack.c.h.b16 %v228
    %v306 = vunpack.c.l.b16 %v229
    %v307 = vunpack.c.h.b16 %v229
    %v308 = vunpack.c.l.b16 %v230
    %v309 = vunpack.c.h.b16 %v230
    %v310 = vunpack.c.l.b16 %v231
    %v311 = vunpack.c.h.b16 %v231
    %v312 = vunpack.c.l.b16 %v232
    %v313 = vunpack.c.h.b16 %v232
    %v314 = vunpack.c.l.b16 %v233
    %v315 = vunpack.c.h.b16 %v233
    %v316 = vunpack.c.l.b16 %v234
    %v317 = vunpack.c.h.b16 %v234
    %v318 = vunpack.c.l.b16 %v235
    %v319 = vunpack.c.h.b16 %v235
    %v320 = vunpack.c.l.b16 %v236
    %v321 = vunpack.c.h.b16 %v236
    %v322 = vunpack.c.l.b16 %v237
    %v323 = vunpack.c.h.b16 %v237
    %v324 = vunpack.c.l.b16 %v238
    %v325 = vunpack.c.h.b16 %v238
    %v326 = vunpack.c.l.b16 %v239
    %v327 = vunpack.c.h.b16 %v239
    %v328 = vunpack.c.l.b16 %v240
    %v329 = vunpack.c.h.b16 %v240
    %v330 = vunpack.c.l.b16 %v241
    %v331 = vunpack.c.h.b16 %v241
    %v332 = vunpack.c.l.b16 %v242
    %v333 = vunpack.c.h.b16 %v242
    %v334 = vunpack.c.l.b16 %v243
    %v335 = vunpack.c.h.b16 %v243
    %v336 = vunpack.c.l.b16 %v244
    %v337 = vunpack.c.h.b16 %v244
    %v338 = vunpack.c.l.b16 %v245
    %v339 = vunpack.c.h.b16 %v245
    %v340 = vunpack.c.l.b16 %v246
    %v341 = vunpack.c.h.b16 %v246
    %v342 = vunpack.c.l.b16 %v247
    %v343 = vunpack.c.h.b16 %v247
    %v344 = vunpack.c.l.b16 %v248
    %v345 = vunpack.c.h.b16 %v248
    %v346 = vunpack.c.l.b16 %v249
    %v347 = vunpack.c.h.b16 %v249
    %v348 = vunpack.c.l.b16 %v250
    %v349 = vunpack.c.h.b16 %v250
    %v350 = vunpack.c.l.b16 %v251
    %v351 = vunpack.c.h.b16 %v251
    %v352 = vunpack.c.l.b16 %v252
    %v353 = vunpack.c.h.b16 %v252
    %v354 = vunpack.c.l.b16 %v253
    %v355 = vunpack.c.h.b16 %v253
    %v356 = vpack.c.b16 %v294, %v292
    %v357 = vpack.c.b16 %v295, %v293
    %v358 = vpack.c.b16 %v298, %v296
    %v359 = vpack.c.b16 %v299, %v297
    %v360 = vpack.c.b16 %v302, %v300
    %v361 = vpack.c.b16 %v303, %v301
    %v362 = vpack.c.b16 %v306, %v304
    %v363 = vpack.c.b16 %v307, %v305
    %v364 = vpack.c.b16 %v310, %v308
    %v365 = vpack.c.b16 %v311, %v309
    %v366 = vpack.c.b16 %v314, %v312
    %v367 = vpack.c.b16 %v315, %v313
    %v368 = vpack.c.b16 %v318, %v316
    %v369 = vpack.c.b16 %v319, %v317
    %v370 = vpack.c.b16 %v322, %v320
    %v371 = vpack.c.b16 %v323, %v321
    %v372 = vpack.c.b16 %v326, %v324
    %v373 = vpack.c.b16 %v327, %v325
    %v374 = vpack.c.b16 %v330, %v328
    %v375 = vpack.c.b16 %v331, %v329
    %v376 = vpack.c.b16 %v334, %v332
    %v377 = vpack.c.b16 %v335, %v333
    %v378 = vpack.c.b16 %v338, %v336
    %v379 = vpack.c.b16 %v339, %v337
    %v380 = vpack.c.b16 %v342, %v340
    %v381 = vpack.c.b16 %v343, %v341
    %v382 = vpack.c.b16 %v346, %v344
    %v383 = vpack.c.b16 %v347, %v345
    %v384 = vpack.c.b16 %v350, %v348
    %v385 = vpack.c.b16 %v351, %v349
    %v386 = vpack.c.b16 %v354, %v352
    %v387 = vpack.c.b16 %v355, %v353
    %420 = vmatpush.bf16.msra.mxu0 %v370
    %421 = vmatpush.bf16.msra.mxu0 %v368
    %422 = vmatpush.bf16.msra.mxu0 %v366
    %423 = vmatpush.bf16.msra.mxu0 %v364
    %424 = vmatpush.bf16.msra.mxu0 %v362
    %425 = vmatpush.bf16.msra.mxu0 %v360
    %426 = vmatpush.bf16.msra.mxu0 %v358
    %427 = vmatpush.bf16.msra.mxu0 %v356
    %428 = vmatmul.bf16.gmra.mxu0 %v220
    %v429 = vpop.f32.mrf.mxu0
    %v430 = vadd.f32 %v256, %v429
    %v431 = vpop.f32.mrf.mxu0
    %432 = vdwg.mxu0
    %433 = vmatpush.bf16.msra.mxu0 %v386
    %434 = vmatpush.bf16.msra.mxu0 %v384
    %435 = vmatpush.bf16.msra.mxu0 %v382
    %436 = vmatpush.bf16.msra.mxu0 %v380
    %437 = vmatpush.bf16.msra.mxu0 %v378
    %438 = vmatpush.bf16.msra.mxu0 %v376
    %439 = vmatpush.bf16.msra.mxu0 %v374
    %440 = vmatpush.bf16.msra.mxu0 %v372
    %441 = vmatmul.bf16.gmra.mxu0 %v221
    %v442 = vpop.f32.mrf.mxu0
    %v443 = vadd.f32 %v430, %v442
    %v444 = vpop.f32.mrf.mxu0
    %445 = vdwg.mxu0
    %446 = vmatpush.bf16.msra.mxu0 %v371
    %447 = vmatpush.bf16.msra.mxu0 %v369
    %448 = vmatpush.bf16.msra.mxu0 %v367
    %449 = vmatpush.bf16.msra.mxu0 %v365
    %450 = vmatpush.bf16.msra.mxu0 %v363
    %451 = vmatpush.bf16.msra.mxu0 %v361
    %452 = vmatpush.bf16.msra.mxu0 %v359
    %453 = vmatpush.bf16.msra.mxu0 %v357
    %454 = vmatmul.bf16.gmra.mxu0 %v220
    %v455 = vpop.f32.mrf.mxu0
    %v456 = vadd.f32 %v257, %v455
    %v457 = vpop.f32.mrf.mxu0
    %458 = vdwg.mxu0
    %459 = vmatpush.bf16.msra.mxu0 %v387
    %460 = vmatpush.bf16.msra.mxu0 %v385
    %461 = vmatpush.bf16.msra.mxu0 %v383
    %462 = vmatpush.bf16.msra.mxu0 %v381
    %463 = vmatpush.bf16.msra.mxu0 %v379
    %464 = vmatpush.bf16.msra.mxu0 %v377
    %465 = vmatpush.bf16.msra.mxu0 %v375
    %466 = vmatpush.bf16.msra.mxu0 %v373
    %467 = vmatmul.bf16.gmra.mxu0 %v221
    %v468 = vpop.f32.mrf.mxu0
    %v469 = vadd.f32 %v456, %v468
    %v470 = vpop.f32.mrf.mxu0
    %471 = vdwg.mxu0
    %v472 = vmax.f32 %v443, 0.0
    %v473 = vmax.f32 %v469, 0.0
    %v474 = vpack.c.bf16 %v472, %v472
    %v475 = vpack.c.bf16 %v473, %v473
    %v476 = vld [vmem:[%s7] sm:$0xf]
    %v477 = vld [vmem:[%s7 + $0x4] sm:$0xf]
    %v478 = vld [vmem:[%s7 + $0x8] sm:$0xf]
    %v479 = vld [vmem:[%s7 + $0xc] sm:$0xf]
    %v480 = vld [vmem:[%s7 + $0x10] sm:$0xf]
    %v481 = vld [vmem:[%s7 + $0x14] sm:$0xf]
    %v482 = vld [vmem:[%s7 + $0x18] sm:$0xf]
    %v483 = vld [vmem:[%s7 + $0x1c] sm:$0xf]
    %v484 = vld [vmem:[%s7 + $0x20] sm:$0xf]
    %v485 = vld [vmem:[%s7 + $0x24] sm:$0xf]
    %v486 = vld [vmem:[%s7 + $0x28] sm:$0xf]
    %v487 = vld [vmem:[%s7 + $0x2c] sm:$0xf]
    %v488 = vld [vmem:[%s7 + $0x30] sm:$0xf]
    %v489 = vld [vmem:[%s7 + $0x34] sm:$0xf]
    %v490 = vld [vmem:[%s7 + $0x38] sm:$0xf]
    %v491 = vld [vmem:[%s7 + $0x3c] sm:$0xf]
    %v492 = vld [vmem:[%s7 + $0x40] sm:$0xf]
    %v493 = vld [vmem:[%s7 + $0x44] sm:$0xf]
    %v494 = vld [vmem:[%s7 + $0x48] sm:$0xf]
    %v495 = vld [vmem:[%s7 + $0x4c] sm:$0xf]
    %v496 = vld [vmem:[%s7 + $0x50] sm:$0xf]
    %v497 = vld [vmem:[%s7 + $0x54] sm:$0xf]
    %v498 = vld [vmem:[%s7 + $0x58] sm:$0xf]
    %v499 = vld [vmem:[%s7 + $0x5c] sm:$0xf]
    %v500 = vld [vmem:[%s7 + $0x60] sm:$0xf]
    %v501 = vld [vmem:[%s7 + $0x64] sm:$0xf]
    %v502 = vld [vmem:[%s7 + $0x68] sm:$0xf]
    %v503 = vld [vmem:[%s7 + $0x6c] sm:$0xf]
    %v504 = vld [vmem:[%s7 + $0x70] sm:$0xf]
    %v505 = vld [vmem:[%s7 + $0x74] sm:$0xf]
    %v506 = vld [vmem:[%s7 + $0x78] sm:$0xf]
    %v507 = vld [vmem:[%s7 + $0x7c] sm:$0xf]
    %v508 = vld [vmem:[%s8] sm:$0x1]
    %v510 = vperm.slane %v508, 0
    %v544 = vunpack.c.l.b16 %v476
    %v545 = vunpack.c.l.b16 %v477
    %v546 = vunpack.c.l.b16 %v478
    %v547 = vunpack.c.l.b16 %v479
    %v548 = vunpack.c.l.b16 %v480
    %v549 = vunpack.c.l.b16 %v481
    %v550 = vunpack.c.l.b16 %v482
    %v551 = vunpack.c.l.b16 %v483
    %v552 = vunpack.c.l.b16 %v484
    %v553 = vunpack.c.l.b16 %v485
    %v554 = vunpack.c.l.b16 %v486
    %v555 = vunpack.c.l.b16 %v487
    %v556 = vunpack.c.l.b16 %v488
    %v557 = vunpack.c.l.b16 %v489
    %v558 = vunpack.c.l.b16 %v490
    %v559 = vunpack.c.l.b16 %v491
    %v560 = vunpack.c.l.b16 %v492
    %v561 = vunpack.c.l.b16 %v493
    %v562 = vunpack.c.l.b16 %v494
    %v563 = vunpack.c.l.b16 %v495
    %v564 = vunpack.c.l.b16 %v496
    %v565 = vunpack.c.l.b16 %v497
    %v566 = vunpack.c.l.b16 %v498
    %v567 = vunpack.c.l.b16 %v499
    %v568 = vunpack.c.l.b16 %v500
    %v569 = vunpack.c.l.b16 %v501
    %v570 = vunpack.c.l.b16 %v502
    %v571 = vunpack.c.l.b16 %v503
    %v572 = vunpack.c.l.b16 %v504
    %v573 = vunpack.c.l.b16 %v505
    %v574 = vunpack.c.l.b16 %v506
    %v575 = vunpack.c.l.b16 %v507
    %v576 = vpack.c.b16 %v545, %v544
    %v577 = vpack.c.b16 %v547, %v546
    %v578 = vpack.c.b16 %v549, %v548
    %v579 = vpack.c.b16 %v551, %v550
    %v580 = vpack.c.b16 %v553, %v552
    %v581 = vpack.c.b16 %v555, %v554
    %v582 = vpack.c.b16 %v557, %v556
    %v583 = vpack.c.b16 %v559, %v558
    %v584 = vpack.c.b16 %v561, %v560
    %v585 = vpack.c.b16 %v563, %v562
    %v586 = vpack.c.b16 %v565, %v564
    %v587 = vpack.c.b16 %v567, %v566
    %v588 = vpack.c.b16 %v569, %v568
    %v589 = vpack.c.b16 %v571, %v570
    %v590 = vpack.c.b16 %v573, %v572
    %v591 = vpack.c.b16 %v575, %v574
    %608 = vmatpush.bf16.msra.mxu0 %v583
    %609 = vmatpush.bf16.msra.mxu0 %v582
    %610 = vmatpush.bf16.msra.mxu0 %v581
    %611 = vmatpush.bf16.msra.mxu0 %v580
    %612 = vmatpush.bf16.msra.mxu0 %v579
    %613 = vmatpush.bf16.msra.mxu0 %v578
    %614 = vmatpush.bf16.msra.mxu0 %v577
    %615 = vmatpush.bf16.msra.mxu0 %v576
    %616 = vmatmul.bf16.gmra.mxu0 %v474
    %v617 = vpop.f32.mrf.mxu0
    %v618 = vadd.f32 %v510, %v617
    %v619 = vpop.f32.mrf.mxu0
    %620 = vdwg.mxu0
    %621 = vmatpush.bf16.msra.mxu0 %v591
    %622 = vmatpush.bf16.msra.mxu0 %v590
    %623 = vmatpush.bf16.msra.mxu0 %v589
    %624 = vmatpush.bf16.msra.mxu0 %v588
    %625 = vmatpush.bf16.msra.mxu0 %v587
    %626 = vmatpush.bf16.msra.mxu0 %v586
    %627 = vmatpush.bf16.msra.mxu0 %v585
    %628 = vmatpush.bf16.msra.mxu0 %v584
    %629 = vmatmul.bf16.gmra.mxu0 %v475
    %v630 = vpop.f32.mrf.mxu0
    %v631 = vadd.f32 %v618, %v630
    %v632 = vpop.f32.mrf.mxu0
    %633 = vdwg.mxu0
    %vm634 = vcmask 517120
    %635 = vst.msk [vmem:[#allocation5] sm:$0x3] %vm634, %v631
    // Predicated region
    $region42: #{tpu_custom_call.1} parent=1 // pred_check
      _
    $region43: #{tpu_custom_call.1} parent=1 // pred_check_branch
      %637 = sbr.rel (0) target = $region45
    $region44: #{tpu_custom_call.1} parent=1 // pred_region
      %639 = vsyncadd [#allocation4], 0
      %s641 = sshll.u32 [#allocation5], 4
      %s642 = int_to_ptr.vmem [resolvable:$true] %s641
      %s643 = sshll.u32 %s9, 4
      %s644 = int_to_ptr.hbm [resolvable:$true] %s643
      %646 = dma.vmem_to_hbm [thread:$0]  %s642, 32, %s644, [#allocation4]
    $region45: #{tpu_custom_call.1} parent=1 // pred_fallthru
      _
    // Predicated region
    $region46: #{tpu_custom_call.1} parent=1 // pred_check
      _
    $region47: #{tpu_custom_call.1} parent=1 // pred_check_branch
      %648 = sbr.rel (0) target = $region49
    $region48: #{tpu_custom_call.1} parent=1 // pred_region
      %650 = dma.done [#allocation4], 32
    $region49: #{tpu_custom_call.1} parent=1 // pred_fallthru
      _
    %651 = vsyncpa [#allocation3], 1
    %652 = vsyncpa [#allocation4], 1

</llo_original>
